<compile_context>
chip_gen: v5e
topology: v5e:2x2
jax: 0.10.0
libtpu: 0.0.40
codegen_flags: <defaults>
</compile_context>

<pallas_src>
import functools

import jax
import jax.numpy as jnp
from jax.experimental import pallas as pl
from jax.experimental.pallas import tpu as pltpu


def _round_up(v, m):
    return ((v + m - 1) // m) * m


def _tpu_vmem_info():
    """Returns (physical VMEM bytes, is_v7x_like). Conservative fallback if unknown."""
    try:
        cap = int(pltpu.get_tpu_info().vmem_capacity_bytes)
    except Exception:
        cap = 64 * 1024 * 1024          # conservative: assume the smallest-VMEM generation
    return cap, cap <= 64 * 1024 * 1024


def _choose_tile(E, d_in, tile_e, is_v7x, in_itemsize):
    """Edge rows per grid step: 128-aligned, sized so the streamed block is ~1 MiB."""
    if tile_e is not None:
        tile = int(tile_e)
    else:
        tile = (1 << 20) // max(1, d_in * in_itemsize)    # ~1 MiB input block
    tile = _round_up(max(256, min(tile, 8192)), 128)
    tile = min(tile, _round_up(E, 128))                   # don't over-pad tiny E
    if is_v7x:
        # Keep >= ~8 "parallel" grid steps for megacore sharding when E allows.
        tile = min(tile, max(128, _round_up(-(-E // 8), 128)))
    # Keep the double-buffered streamed input under ~16 MiB even for very wide d_in.
    tile = min(tile, max(128, ((16 << 20) // max(1, 2 * d_in * in_itemsize)) // 128 * 128))
    return tile


def _make_mlp_kernel(num_hidden, lane_dense_out, compute_dtype):
    """Kernel refs layout: (xe_ref, W0, b0, W1, b1, ..., W_last, b_last, o_ref)."""

    def kernel(xe_ref, *refs):
        o_ref = refs[-1]
        wb = refs[:-1]
        h = xe_ref[...]                                    # (tile, d_in) bf16
        for layer in range(num_hidden):
            w = wb[2 * layer][...]                         # (d_in, d_out) bf16
            b = wb[2 * layer + 1][...]                     # (1, d_out) f32
            h = jnp.dot(h.astype(compute_dtype), w,
                        preferred_element_type=jnp.float32) + b
            h = jnp.maximum(h, 0.0)                        # ReLU (f32 VPU); Dropout/LN = identity
        w = wb[2 * num_hidden][...]
        b = wb[2 * num_hidden + 1][...]
        if lane_dense_out:
            # out_channels == 1: (1, d_h) x (tile, d_h)^T matvec -> lane-major (1, tile)
            # result, written as an unmasked full-lane block (no (tile,1) masked stores).
            out = jnp.einsum("od,td->ot", w, h.astype(jnp.float32),
                             preferred_element_type=jnp.float32) + b
            o_ref[...] = out[None].astype(o_ref.dtype)     # (1, 1, tile)
        else:
            out = jnp.dot(h.astype(compute_dtype), w,
                          preferred_element_type=jnp.float32) + b
            o_ref[...] = out.astype(o_ref.dtype)

    return kernel


def link_predictor_forward(x, adj, tar_ei, params, *, tile_e=None,
                           compute_dtype=jnp.bfloat16):
    """params: list of (W, b) with W shape (d_in, d_out), b shape (d_out,)."""
    del adj  # unused by the reference forward pass
    num_layers = len(params)
    d_in = params[0][0].shape[0]
    out_dim = params[-1][0].shape[1]
    E = tar_ei.shape[1]

    in_itemsize = jnp.dtype(compute_dtype).itemsize
    vmem_cap, is_v7x = _tpu_vmem_info()
    tile = _choose_tile(E, d_in, tile_e, is_v7x, in_itemsize)
    E_pad = _round_up(E, tile)
    grid = E_pad // tile

    # Pad the (2, E) index array (cheap) rather than the (E, d_in) features; padded
    # rows gather node 0 and are sliced off before returning.
    ei = tar_ei
    if E_pad != E:
        ei = jnp.pad(tar_ei, ((0, 0), (0, E_pad - E)))
    # Cast x to bf16 *before* the gather: halves gather read traffic; the gather +
    # endpoint product fuse into a single XLA pass producing xe exactly once.
    x_c = x.astype(compute_dtype)
    xe = x_c[ei[0]] * x_c[ei[1]]                           # (E_pad, d_in) bf16

    lane_dense_out = (out_dim == 1)
    num_hidden = num_layers - 1

    flat_args = []
    in_specs = [pl.BlockSpec((tile, d_in), lambda i: (i, 0))]
    # Hidden-layer weights (bf16 MXU operands) + f32 biases, VMEM-resident
    # (constant index_map -> fetched once, not per grid step).
    for (w, b) in params[:num_hidden]:
        w_c = w.astype(compute_dtype)
        b2 = b.reshape(1, -1).astype(jnp.float32)
        flat_args += [w_c, b2]
        in_specs += [pl.BlockSpec(w_c.shape, lambda i: (0, 0)),
                     pl.BlockSpec(b2.shape, lambda i: (0, 0))]
    # Final layer.
    w_last, b_last = params[-1]
    if lane_dense_out:
        w_l = w_last.reshape(1, -1).astype(jnp.float32)    # (1, d_hidden)
        b_l = b_last.reshape(1, 1).astype(jnp.float32)
    else:
        w_l = w_last.astype(compute_dtype)
        b_l = b_last.reshape(1, -1).astype(jnp.float32)
    flat_args += [w_l, b_l]
    in_specs += [pl.BlockSpec(w_l.shape, lambda i: (0, 0)),
                 pl.BlockSpec(b_l.shape, lambda i: (0, 0))]

    kernel = _make_mlp_kernel(num_hidden, lane_dense_out, compute_dtype)

    if lane_dense_out:
        # (grid, 1, tile) output: last two block dims equal the full array dims,
        # so the store is a full-lane, unmasked (1, tile) slab per grid step.
        out_shape = jax.ShapeDtypeStruct((grid, 1, tile), jnp.float32)
        out_spec = pl.BlockSpec((1, 1, tile), lambda i: (i, 0, 0))
        out_buf_bytes = 2 * 8 * tile * 4                   # 1-row block pads to 8 sublanes, 2 bufs
    else:
        out_shape = jax.ShapeDtypeStruct((E_pad, out_dim), jnp.float32)
        out_spec = pl.BlockSpec((tile, out_dim), lambda i: (i, 0))
        out_buf_bytes = 2 * tile * _round_up(out_dim, 128) * 4

    # VMEM budget: streamed xe (2 buffers) + weights/biases (counted 2x: constant
    # index_map blocks are still double-buffered by default) + output buffers,
    # with headroom; ceiling set per generation (~48 MiB on v7x, ~100 MiB on v5e/v6e).
    vmem_est = 2 * tile * d_in * in_itemsize
    vmem_est += 2 * sum(int(a.size) * a.dtype.itemsize for a in flat_args)
    vmem_est += out_buf_bytes
    ceiling = (48 << 20) if is_v7x else (100 << 20)
    vmem_limit = int(min(ceiling, max(int(1.5 * vmem_est) + (4 << 20), 16 << 20)))

    out = pl.pallas_call(
        kernel,
        out_shape=out_shape,
        grid=(grid,),
        in_specs=in_specs,
        out_specs=out_spec,
        compiler_params=pltpu.CompilerParams(
            dimension_semantics=("parallel",),
            vmem_limit_bytes=vmem_limit,
        ),
    )(xe, *flat_args)

    if lane_dense_out:
        out = out.reshape(E_pad, 1)[:E]
    else:
        out = out[:E]
    # .expand(-1, len(cndropprobs)+1) with cndropprobs=[] -> (E, 1): no-op.
    return out.astype(x.dtype)


def init_params(key, in_channels, hidden_channels, out_channels, num_layers):
    """Deterministic nn.Linear-style init; weights stored as (d_in, d_out)."""
    dims = [in_channels] + [hidden_channels] * (num_layers - 1) + [out_channels]
    params = []
    for layer in range(num_layers):
        d_in, d_out = dims[layer], dims[layer + 1]
        key, kw, kb = jax.random.split(key, 3)
        bound = 1.0 / (d_in ** 0.5)
        w = jax.random.uniform(kw, (d_in, d_out), jnp.float32, -bound, bound)
        b = jax.random.uniform(kb, (d_out,), jnp.float32, -bound, bound)
        params.append((w, b))
    return params


def reference_forward(x, tar_ei, params):
    h = x[tar_ei[0]] * x[tar_ei[1]]
    for i, (w, b) in enumerate(params):
        h = h @ w + b
        if i < len(params) - 1:
            h = jnp.maximum(h, 0.0)
    return h


if __name__ == "__main__":
    key = jax.random.PRNGKey(0)
    k_x, k_ei, k_p = jax.random.split(key, 3)

    num_nodes = 128
    in_channels = 64
    hidden_channels = 64
    out_channels = 1
    num_layers = 3
    num_edges = 300  # deliberately not a multiple of the tile -> exercises index padding

    x = jax.random.normal(k_x, (num_nodes, in_channels), jnp.float32)
    tar_ei = jax.random.randint(k_ei, (2, num_edges), 0, num_nodes, jnp.int32)
    adj = None  # unused by the forward pass
    params = init_params(k_p, in_channels, hidden_channels, out_channels, num_layers)

    fwd = jax.jit(functools.partial(link_predictor_forward))  # tile_e=None -> auto-sized tile
    out = fwd(x, adj, tar_ei, params)
    out = jax.block_until_ready(out)

    ref = reference_forward(x, tar_ei, params)
    assert out.shape == (num_edges, out_channels)
    # bf16 endpoint product + bf16 MXU operands with f32 accumulation -> ~2e-2 tolerance.
    assert jnp.allclose(out, ref, atol=2e-2, rtol=2e-2)

    print("KERNEL_OK")
</pallas_src>

<mosaic_0001>
module attributes {stable_mosaic.version = 11 : i64} {
  func.func @kernel(%arg0: i32, %arg1: memref<128x64xbf16, #tpu.memory_space<vmem>>, %arg2: memref<64x64xbf16, #tpu.memory_space<vmem>>, %arg3: memref<1x64xf32, #tpu.memory_space<vmem>>, %arg4: memref<64x64xbf16, #tpu.memory_space<vmem>>, %arg5: memref<1x64xf32, #tpu.memory_space<vmem>>, %arg6: memref<1x64xf32, #tpu.memory_space<vmem>>, %arg7: memref<1x1xf32, #tpu.memory_space<vmem>>, %arg8: memref<1x1x128xf32, #tpu.memory_space<vmem>>) attributes {dimension_semantics = [#tpu.dimension_semantics<parallel>], iteration_bounds = array<i64: 3>, scalar_prefetch = 0 : i64, scratch_operands = 0 : i64, tpu.core_type = #tpu.core_type<tc>, window_params = [{transform_indices = @transform_0, window_bounds = array<i64: 128, 64>}, {pipeline_mode = #tpu.pipeline_mode<synchronous>, transform_indices = @transform_1, window_bounds = array<i64: 64, 64>}, {pipeline_mode = #tpu.pipeline_mode<synchronous>, transform_indices = @transform_2, window_bounds = array<i64: 1, 64>}, {pipeline_mode = #tpu.pipeline_mode<synchronous>, transform_indices = @transform_3, window_bounds = array<i64: 64, 64>}, {pipeline_mode = #tpu.pipeline_mode<synchronous>, transform_indices = @transform_4, window_bounds = array<i64: 1, 64>}, {pipeline_mode = #tpu.pipeline_mode<synchronous>, transform_indices = @transform_5, window_bounds = array<i64: 1, 64>}, {pipeline_mode = #tpu.pipeline_mode<synchronous>, transform_indices = @transform_6, window_bounds = array<i64: 1, 1>}, {transform_indices = @transform_7, window_bounds = array<i64: 1, 1, 128>}]} {
    %c0 = arith.constant 0 : index
    %c0_0 = arith.constant 0 : index
    %0 = vector.load %arg1[%c0, %c0_0] : memref<128x64xbf16, #tpu.memory_space<vmem>>, vector<128x64xbf16>
    %c0_1 = arith.constant 0 : index
    %c0_2 = arith.constant 0 : index
    %1 = vector.load %arg2[%c0_1, %c0_2] : memref<64x64xbf16, #tpu.memory_space<vmem>>, vector<64x64xbf16>
    %c0_3 = arith.constant 0 : index
    %c0_4 = arith.constant 0 : index
    %2 = vector.load %arg3[%c0_3, %c0_4] : memref<1x64xf32, #tpu.memory_space<vmem>>, vector<1x64xf32>
    %cst = arith.constant dense<0.000000e+00> : vector<128x64xf32>
    %3 = tpu.matmul %0, %1, %cst {dimension_numbers = #tpu.dot_dimension_numbers<[1], [0], [0], [1], [0, 0, 1, 1], [], []>} : vector<128x64xbf16>, vector<64x64xbf16>, vector<128x64xf32> -> vector<128x64xf32>
    %4 = vector.broadcast %2 : vector<1x64xf32> to vector<128x64xf32>
    %5 = arith.addf %3, %4 : vector<128x64xf32>
    %cst_5 = arith.constant 0.000000e+00 : f32
    %6 = vector.broadcast %cst_5 : f32 to vector<128x64xf32>
    %7 = arith.maximumf %5, %6 : vector<128x64xf32>
    %c0_6 = arith.constant 0 : index
    %c0_7 = arith.constant 0 : index
    %8 = vector.load %arg4[%c0_6, %c0_7] : memref<64x64xbf16, #tpu.memory_space<vmem>>, vector<64x64xbf16>
    %c0_8 = arith.constant 0 : index
    %c0_9 = arith.constant 0 : index
    %9 = vector.load %arg5[%c0_8, %c0_9] : memref<1x64xf32, #tpu.memory_space<vmem>>, vector<1x64xf32>
    %10 = arith.truncf %7 : vector<128x64xf32> to vector<128x64xbf16>
    %cst_10 = arith.constant dense<0.000000e+00> : vector<128x64xf32>
    %11 = tpu.matmul %10, %8, %cst_10 {dimension_numbers = #tpu.dot_dimension_numbers<[1], [0], [0], [1], [0, 0, 1, 1], [], []>} : vector<128x64xbf16>, vector<64x64xbf16>, vector<128x64xf32> -> vector<128x64xf32>
    %12 = vector.broadcast %9 : vector<1x64xf32> to vector<128x64xf32>
    %13 = arith.addf %11, %12 : vector<128x64xf32>
    %cst_11 = arith.constant 0.000000e+00 : f32
    %14 = vector.broadcast %cst_11 : f32 to vector<128x64xf32>
    %15 = arith.maximumf %13, %14 : vector<128x64xf32>
    %c0_12 = arith.constant 0 : index
    %c0_13 = arith.constant 0 : index
    %16 = vector.load %arg6[%c0_12, %c0_13] : memref<1x64xf32, #tpu.memory_space<vmem>>, vector<1x64xf32>
    %c0_14 = arith.constant 0 : index
    %c0_15 = arith.constant 0 : index
    %17 = vector.load %arg7[%c0_14, %c0_15] : memref<1x1xf32, #tpu.memory_space<vmem>>, vector<1x1xf32>
    "tpu.trace_start"() <{level = 10 : i32, message = "od,td->ot"}> : () -> ()
    %cst_16 = arith.constant dense<0.000000e+00> : vector<1x128xf32>
    %18 = tpu.matmul %16, %15, %cst_16 {dimension_numbers = #tpu.dot_dimension_numbers<[1], [1], [0], [0], [0, 0, 1, 0], [], []>} : vector<1x64xf32>, vector<128x64xf32>, vector<1x128xf32> -> vector<1x128xf32>
    "tpu.trace_stop"() : () -> ()
    %19 = vector.broadcast %17 : vector<1x1xf32> to vector<1x128xf32>
    %20 = arith.addf %18, %19 : vector<1x128xf32>
    %21 = vector.shape_cast %20 : vector<1x128xf32> to vector<1x1x128xf32>
    %c0_17 = arith.constant 0 : index
    %c0_18 = arith.constant 0 : index
    %c0_19 = arith.constant 0 : index
    %22 = vector.load %arg8[%c0_17, %c0_18, %c0_19] : memref<1x1x128xf32, #tpu.memory_space<vmem>>, vector<1x1x128xf32>
    tpu.vector_store %arg8[%c0_17, %c0_18, %c0_19], %21 {strides = array<i32>} : memref<1x1x128xf32, #tpu.memory_space<vmem>>, vector<1x1x128xf32>,
    return
  }
  func.func @transform_0(%arg0: i32) -> (i32, i32) {
    %c0_i32 = arith.constant 0 : i32
    %c0_i32_0 = arith.constant 0 : i32
    return %arg0, %c0_i32 : i32, i32
  }
  func.func @transform_1(%arg0: i32) -> (i32, i32) {
    %c0_i32 = arith.constant 0 : i32
    %c0_i32_0 = arith.constant 0 : i32
    %c0_i32_1 = arith.constant 0 : i32
    return %c0_i32, %c0_i32_0 : i32, i32
  }
  func.func @transform_2(%arg0: i32) -> (i32, i32) {
    %c0_i32 = arith.constant 0 : i32
    %c0_i32_0 = arith.constant 0 : i32
    %c0_i32_1 = arith.constant 0 : i32
    return %c0_i32, %c0_i32_0 : i32, i32
  }
  func.func @transform_3(%arg0: i32) -> (i32, i32) {
    %c0_i32 = arith.constant 0 : i32
    %c0_i32_0 = arith.constant 0 : i32
    %c0_i32_1 = arith.constant 0 : i32
    return %c0_i32, %c0_i32_0 : i32, i32
  }
  func.func @transform_4(%arg0: i32) -> (i32, i32) {
    %c0_i32 = arith.constant 0 : i32
    %c0_i32_0 = arith.constant 0 : i32
    %c0_i32_1 = arith.constant 0 : i32
    return %c0_i32, %c0_i32_0 : i32, i32
  }
  func.func @transform_5(%arg0: i32) -> (i32, i32) {
    %c0_i32 = arith.constant 0 : i32
    %c0_i32_0 = arith.constant 0 : i32
    %c0_i32_1 = arith.constant 0 : i32
    return %c0_i32, %c0_i32_0 : i32, i32
  }
  func.func @transform_6(%arg0: i32) -> (i32, i32) {
    %c0_i32 = arith.constant 0 : i32
    %c0_i32_0 = arith.constant 0 : i32
    %c0_i32_1 = arith.constant 0 : i32
    return %c0_i32, %c0_i32_0 : i32, i32
  }
  func.func @transform_7(%arg0: i32) -> (i32, i32, i32) {
    %c0_i32 = arith.constant 0 : i32
    %c0_i32_0 = arith.constant 0 : i32
    %c0_i32_1 = arith.constant 0 : i32
    return %arg0, %c0_i32, %c0_i32_0 : i32, i32, i32
  }
}

</mosaic_0001>

<llo_original>
// kernel: mul.1
$region0: #{mul.1}
  #allocation0 [shape = 's32[1]{0}', space=sflag, size = 0x4, scoped, tag = 'scoped memory for mul.1']
  %s0 = inlined_call_operand.vmem [shape: bf16[384,64], index: 0, kind: input, shape index: {}]
  %s1 = inlined_call_operand.vmem [shape: bf16[384,64], index: 1, kind: input, shape index: {}]
  %s2 = inlined_call_operand.vmem [shape: bf16[384,64], index: 2, kind: output, shape index: {}]
  %v3 = vld [vmem:[%s0] sm:$0xf]
  %v4 = vunpack.c.l.bf16 %v3
  %v5 = vunpack.c.h.bf16 %v3
  %v6 = vld [vmem:[%s1] sm:$0xf]
  %v7 = vunpack.c.l.bf16 %v6
  %v8 = vunpack.c.h.bf16 %v6
  %9 = xla_tuple %v4, %v7
  %10 = xla_tuple %9
  %v11 = vmul.f32 %v4, %v7
  %12 = xla_tuple %v11
  %v13 = vpack.c.bf16 0.0, %v11
  %14 = vst [vmem:[%s2] sm:$0xf] %v13
  %s15 = scalar_lea.vmem %s0, 4
  %v16 = vld [vmem:[%s15] sm:$0xf]
  %v17 = vunpack.c.l.bf16 %v16
  %v18 = vunpack.c.h.bf16 %v16
  %s19 = scalar_lea.vmem %s1, 4
  %v20 = vld [vmem:[%s19] sm:$0xf]
  %v21 = vunpack.c.l.bf16 %v20
  %v22 = vunpack.c.h.bf16 %v20
  %23 = xla_tuple %v17, %v21
  %24 = xla_tuple %23
  %v25 = vmul.f32 %v17, %v21
  %26 = xla_tuple %v25
  %s27 = scalar_lea.vmem %s2, 4
  %v28 = vpack.c.bf16 0.0, %v25
  %29 = vst [vmem:[%s27] sm:$0xf] %v28
  %s30 = scalar_lea.vmem %s0, 8
  %v31 = vld [vmem:[%s30] sm:$0xf]
  %v32 = vunpack.c.l.bf16 %v31
  %v33 = vunpack.c.h.bf16 %v31
  %s34 = scalar_lea.vmem %s1, 8
  %v35 = vld [vmem:[%s34] sm:$0xf]
  %v36 = vunpack.c.l.bf16 %v35
  %v37 = vunpack.c.h.bf16 %v35
  %38 = xla_tuple %v32, %v36
  %39 = xla_tuple %38
  %v40 = vmul.f32 %v32, %v36
  %41 = xla_tuple %v40
  %s42 = scalar_lea.vmem %s2, 8
  %v43 = vpack.c.bf16 0.0, %v40
  %44 = vst [vmem:[%s42] sm:$0xf] %v43
  %s45 = scalar_lea.vmem %s0, 12
  %v46 = vld [vmem:[%s45] sm:$0xf]
  %v47 = vunpack.c.l.bf16 %v46
  %v48 = vunpack.c.h.bf16 %v46
  %s49 = scalar_lea.vmem %s1, 12
  %v50 = vld [vmem:[%s49] sm:$0xf]
  %v51 = vunpack.c.l.bf16 %v50
  %v52 = vunpack.c.h.bf16 %v50
  %53 = xla_tuple %v47, %v51
  %54 = xla_tuple %53
  %v55 = vmul.f32 %v47, %v51
  %56 = xla_tuple %v55
  %s57 = scalar_lea.vmem %s2, 12
  %v58 = vpack.c.bf16 0.0, %v55
  %59 = vst [vmem:[%s57] sm:$0xf] %v58
  %s60 = scalar_lea.vmem %s0, 16
  %v61 = vld [vmem:[%s60] sm:$0xf]
  %v62 = vunpack.c.l.bf16 %v61
  %v63 = vunpack.c.h.bf16 %v61
  %s64 = scalar_lea.vmem %s1, 16
  %v65 = vld [vmem:[%s64] sm:$0xf]
  %v66 = vunpack.c.l.bf16 %v65
  %v67 = vunpack.c.h.bf16 %v65
  %68 = xla_tuple %v62, %v66
  %69 = xla_tuple %68
  %v70 = vmul.f32 %v62, %v66
  %71 = xla_tuple %v70
  %s72 = scalar_lea.vmem %s2, 16
  %v73 = vpack.c.bf16 0.0, %v70
  %74 = vst [vmem:[%s72] sm:$0xf] %v73
  %s75 = scalar_lea.vmem %s0, 20
  %v76 = vld [vmem:[%s75] sm:$0xf]
  %v77 = vunpack.c.l.bf16 %v76
  %v78 = vunpack.c.h.bf16 %v76
  %s79 = scalar_lea.vmem %s1, 20
  %v80 = vld [vmem:[%s79] sm:$0xf]
  %v81 = vunpack.c.l.bf16 %v80
  %v82 = vunpack.c.h.bf16 %v80
  %83 = xla_tuple %v77, %v81
  %84 = xla_tuple %83
  %v85 = vmul.f32 %v77, %v81
  %86 = xla_tuple %v85
  %s87 = scalar_lea.vmem %s2, 20
  %v88 = vpack.c.bf16 0.0, %v85
  %89 = vst [vmem:[%s87] sm:$0xf] %v88
  %s90 = scalar_lea.vmem %s0, 24
  %v91 = vld [vmem:[%s90] sm:$0xf]
  %v92 = vunpack.c.l.bf16 %v91
  %v93 = vunpack.c.h.bf16 %v91
  %s94 = scalar_lea.vmem %s1, 24
  %v95 = vld [vmem:[%s94] sm:$0xf]
  %v96 = vunpack.c.l.bf16 %v95
  %v97 = vunpack.c.h.bf16 %v95
  %98 = xla_tuple %v92, %v96
  %99 = xla_tuple %98
  %v100 = vmul.f32 %v92, %v96
  %101 = xla_tuple %v100
  %s102 = scalar_lea.vmem %s2, 24
  %v103 = vpack.c.bf16 0.0, %v100
  %104 = vst [vmem:[%s102] sm:$0xf] %v103
  %s105 = scalar_lea.vmem %s0, 28
  %v106 = vld [vmem:[%s105] sm:$0xf]
  %v107 = vunpack.c.l.bf16 %v106
  %v108 = vunpack.c.h.bf16 %v106
  %s109 = scalar_lea.vmem %s1, 28
  %v110 = vld [vmem:[%s109] sm:$0xf]
  %v111 = vunpack.c.l.bf16 %v110
  %v112 = vunpack.c.h.bf16 %v110
  %113 = xla_tuple %v107, %v111
  %114 = xla_tuple %113
  %v115 = vmul.f32 %v107, %v111
  %116 = xla_tuple %v115
  %s117 = scalar_lea.vmem %s2, 28
  %v118 = vpack.c.bf16 0.0, %v115
  %119 = vst [vmem:[%s117] sm:$0xf] %v118
  %s120 = scalar_lea.vmem %s0, 32
  %v121 = vld [vmem:[%s120] sm:$0xf]
  %v122 = vunpack.c.l.bf16 %v121
  %v123 = vunpack.c.h.bf16 %v121
  %s124 = scalar_lea.vmem %s1, 32
  %v125 = vld [vmem:[%s124] sm:$0xf]
  %v126 = vunpack.c.l.bf16 %v125
  %v127 = vunpack.c.h.bf16 %v125
  %128 = xla_tuple %v122, %v126
  %129 = xla_tuple %128
  %v130 = vmul.f32 %v122, %v126
  %131 = xla_tuple %v130
  %s132 = scalar_lea.vmem %s2, 32
  %v133 = vpack.c.bf16 0.0, %v130
  %134 = vst [vmem:[%s132] sm:$0xf] %v133
  %s135 = scalar_lea.vmem %s0, 36
  %v136 = vld [vmem:[%s135] sm:$0xf]
  %v137 = vunpack.c.l.bf16 %v136
  %v138 = vunpack.c.h.bf16 %v136
  %s139 = scalar_lea.vmem %s1, 36
  %v140 = vld [vmem:[%s139] sm:$0xf]
  %v141 = vunpack.c.l.bf16 %v140
  %v142 = vunpack.c.h.bf16 %v140
  %143 = xla_tuple %v137, %v141
  %144 = xla_tuple %143
  %v145 = vmul.f32 %v137, %v141
  %146 = xla_tuple %v145
  %s147 = scalar_lea.vmem %s2, 36
  %v148 = vpack.c.bf16 0.0, %v145
  %149 = vst [vmem:[%s147] sm:$0xf] %v148
  %s150 = scalar_lea.vmem %s0, 40
  %v151 = vld [vmem:[%s150] sm:$0xf]
  %v152 = vunpack.c.l.bf16 %v151
  %v153 = vunpack.c.h.bf16 %v151
  %s154 = scalar_lea.vmem %s1, 40
  %v155 = vld [vmem:[%s154] sm:$0xf]
  %v156 = vunpack.c.l.bf16 %v155
  %v157 = vunpack.c.h.bf16 %v155
  %158 = xla_tuple %v152, %v156
  %159 = xla_tuple %158
  %v160 = vmul.f32 %v152, %v156
  %161 = xla_tuple %v160
  %s162 = scalar_lea.vmem %s2, 40
  %v163 = vpack.c.bf16 0.0, %v160
  %164 = vst [vmem:[%s162] sm:$0xf] %v163
  %s165 = scalar_lea.vmem %s0, 44
  %v166 = vld [vmem:[%s165] sm:$0xf]
  %v167 = vunpack.c.l.bf16 %v166
  %v168 = vunpack.c.h.bf16 %v166
  %s169 = scalar_lea.vmem %s1, 44
  %v170 = vld [vmem:[%s169] sm:$0xf]
  %v171 = vunpack.c.l.bf16 %v170
  %v172 = vunpack.c.h.bf16 %v170
  %173 = xla_tuple %v167, %v171
  %174 = xla_tuple %173
  %v175 = vmul.f32 %v167, %v171
  %176 = xla_tuple %v175
  %s177 = scalar_lea.vmem %s2, 44
  %v178 = vpack.c.bf16 0.0, %v175
  %179 = vst [vmem:[%s177] sm:$0xf] %v178
  %s180 = scalar_lea.vmem %s0, 48
  %v181 = vld [vmem:[%s180] sm:$0xf]
  %v182 = vunpack.c.l.bf16 %v181
  %v183 = vunpack.c.h.bf16 %v181
  %s184 = scalar_lea.vmem %s1, 48
  %v185 = vld [vmem:[%s184] sm:$0xf]
  %v186 = vunpack.c.l.bf16 %v185
  %v187 = vunpack.c.h.bf16 %v185
  %188 = xla_tuple %v182, %v186
  %189 = xla_tuple %188
  %v190 = vmul.f32 %v182, %v186
  %191 = xla_tuple %v190
  %s192 = scalar_lea.vmem %s2, 48
  %v193 = vpack.c.bf16 0.0, %v190
  %194 = vst [vmem:[%s192] sm:$0xf] %v193
  %s195 = scalar_lea.vmem %s0, 52
  %v196 = vld [vmem:[%s195] sm:$0xf]
  %v197 = vunpack.c.l.bf16 %v196
  %v198 = vunpack.c.h.bf16 %v196
  %s199 = scalar_lea.vmem %s1, 52
  %v200 = vld [vmem:[%s199] sm:$0xf]
  %v201 = vunpack.c.l.bf16 %v200
  %v202 = vunpack.c.h.bf16 %v200
  %203 = xla_tuple %v197, %v201
  %204 = xla_tuple %203
  %v205 = vmul.f32 %v197, %v201
  %206 = xla_tuple %v205
  %s207 = scalar_lea.vmem %s2, 52
  %v208 = vpack.c.bf16 0.0, %v205
  %209 = vst [vmem:[%s207] sm:$0xf] %v208
  %s210 = scalar_lea.vmem %s0, 56
  %v211 = vld [vmem:[%s210] sm:$0xf]
  %v212 = vunpack.c.l.bf16 %v211
  %v213 = vunpack.c.h.bf16 %v211
  %s214 = scalar_lea.vmem %s1, 56
  %v215 = vld [vmem:[%s214] sm:$0xf]
  %v216 = vunpack.c.l.bf16 %v215
  %v217 = vunpack.c.h.bf16 %v215
  %218 = xla_tuple %v212, %v216
  %219 = xla_tuple %218
  %v220 = vmul.f32 %v212, %v216
  %221 = xla_tuple %v220
  %s222 = scalar_lea.vmem %s2, 56
  %v223 = vpack.c.bf16 0.0, %v220
  %224 = vst [vmem:[%s222] sm:$0xf] %v223
  %s225 = scalar_lea.vmem %s0, 60
  %v226 = vld [vmem:[%s225] sm:$0xf]
  %v227 = vunpack.c.l.bf16 %v226
  %v228 = vunpack.c.h.bf16 %v226
  %s229 = scalar_lea.vmem %s1, 60
  %v230 = vld [vmem:[%s229] sm:$0xf]
  %v231 = vunpack.c.l.bf16 %v230
  %v232 = vunpack.c.h.bf16 %v230
  %233 = xla_tuple %v227, %v231
  %234 = xla_tuple %233
  %v235 = vmul.f32 %v227, %v231
  %236 = xla_tuple %v235
  %s237 = scalar_lea.vmem %s2, 60
  %v238 = vpack.c.bf16 0.0, %v235
  %239 = vst [vmem:[%s237] sm:$0xf] %v238
  %s240 = scalar_lea.vmem %s0, 64
  %v241 = vld [vmem:[%s240] sm:$0xf]
  %v242 = vunpack.c.l.bf16 %v241
  %v243 = vunpack.c.h.bf16 %v241
  %s244 = scalar_lea.vmem %s1, 64
  %v245 = vld [vmem:[%s244] sm:$0xf]
  %v246 = vunpack.c.l.bf16 %v245
  %v247 = vunpack.c.h.bf16 %v245
  %248 = xla_tuple %v242, %v246
  %249 = xla_tuple %248
  %v250 = vmul.f32 %v242, %v246
  %251 = xla_tuple %v250
  %s252 = scalar_lea.vmem %s2, 64
  %v253 = vpack.c.bf16 0.0, %v250
  %254 = vst [vmem:[%s252] sm:$0xf] %v253
  %s255 = scalar_lea.vmem %s0, 68
  %v256 = vld [vmem:[%s255] sm:$0xf]
  %v257 = vunpack.c.l.bf16 %v256
  %v258 = vunpack.c.h.bf16 %v256
  %s259 = scalar_lea.vmem %s1, 68
  %v260 = vld [vmem:[%s259] sm:$0xf]
  %v261 = vunpack.c.l.bf16 %v260
  %v262 = vunpack.c.h.bf16 %v260
  %263 = xla_tuple %v257, %v261
  %264 = xla_tuple %263
  %v265 = vmul.f32 %v257, %v261
  %266 = xla_tuple %v265
  %s267 = scalar_lea.vmem %s2, 68
  %v268 = vpack.c.bf16 0.0, %v265
  %269 = vst [vmem:[%s267] sm:$0xf] %v268
  %s270 = scalar_lea.vmem %s0, 72
  %v271 = vld [vmem:[%s270] sm:$0xf]
  %v272 = vunpack.c.l.bf16 %v271
  %v273 = vunpack.c.h.bf16 %v271
  %s274 = scalar_lea.vmem %s1, 72
  %v275 = vld [vmem:[%s274] sm:$0xf]
  %v276 = vunpack.c.l.bf16 %v275
  %v277 = vunpack.c.h.bf16 %v275
  %278 = xla_tuple %v272, %v276
  %279 = xla_tuple %278
  %v280 = vmul.f32 %v272, %v276
  %281 = xla_tuple %v280
  %s282 = scalar_lea.vmem %s2, 72
  %v283 = vpack.c.bf16 0.0, %v280
  %284 = vst [vmem:[%s282] sm:$0xf] %v283
  %s285 = scalar_lea.vmem %s0, 76
  %v286 = vld [vmem:[%s285] sm:$0xf]
  %v287 = vunpack.c.l.bf16 %v286
  %v288 = vunpack.c.h.bf16 %v286
  %s289 = scalar_lea.vmem %s1, 76
  %v290 = vld [vmem:[%s289] sm:$0xf]
  %v291 = vunpack.c.l.bf16 %v290
  %v292 = vunpack.c.h.bf16 %v290
  %293 = xla_tuple %v287, %v291
  %294 = xla_tuple %293
  %v295 = vmul.f32 %v287, %v291
  %296 = xla_tuple %v295
  %s297 = scalar_lea.vmem %s2, 76
  %v298 = vpack.c.bf16 0.0, %v295
  %299 = vst [vmem:[%s297] sm:$0xf] %v298
  %s300 = scalar_lea.vmem %s0, 80
  %v301 = vld [vmem:[%s300] sm:$0xf]
  %v302 = vunpack.c.l.bf16 %v301
  %v303 = vunpack.c.h.bf16 %v301
  %s304 = scalar_lea.vmem %s1, 80
  %v305 = vld [vmem:[%s304] sm:$0xf]
  %v306 = vunpack.c.l.bf16 %v305
  %v307 = vunpack.c.h.bf16 %v305
  %308 = xla_tuple %v302, %v306
  %309 = xla_tuple %308
  %v310 = vmul.f32 %v302, %v306
  %311 = xla_tuple %v310
  %s312 = scalar_lea.vmem %s2, 80
  %v313 = vpack.c.bf16 0.0, %v310
  %314 = vst [vmem:[%s312] sm:$0xf] %v313
  %s315 = scalar_lea.vmem %s0, 84
  %v316 = vld [vmem:[%s315] sm:$0xf]
  %v317 = vunpack.c.l.bf16 %v316
  %v318 = vunpack.c.h.bf16 %v316
  %s319 = scalar_lea.vmem %s1, 84
  %v320 = vld [vmem:[%s319] sm:$0xf]
  %v321 = vunpack.c.l.bf16 %v320
  %v322 = vunpack.c.h.bf16 %v320
  %323 = xla_tuple %v317, %v321
  %324 = xla_tuple %323
  %v325 = vmul.f32 %v317, %v321
  %326 = xla_tuple %v325
  %s327 = scalar_lea.vmem %s2, 84
  %v328 = vpack.c.bf16 0.0, %v325
  %329 = vst [vmem:[%s327] sm:$0xf] %v328
  %s330 = scalar_lea.vmem %s0, 88
  %v331 = vld [vmem:[%s330] sm:$0xf]
  %v332 = vunpack.c.l.bf16 %v331
  %v333 = vunpack.c.h.bf16 %v331
  %s334 = scalar_lea.vmem %s1, 88
  %v335 = vld [vmem:[%s334] sm:$0xf]
  %v336 = vunpack.c.l.bf16 %v335
  %v337 = vunpack.c.h.bf16 %v335
  %338 = xla_tuple %v332, %v336
  %339 = xla_tuple %338
  %v340 = vmul.f32 %v332, %v336
  %341 = xla_tuple %v340
  %s342 = scalar_lea.vmem %s2, 88
  %v343 = vpack.c.bf16 0.0, %v340
  %344 = vst [vmem:[%s342] sm:$0xf] %v343
  %s345 = scalar_lea.vmem %s0, 92
  %v346 = vld [vmem:[%s345] sm:$0xf]
  %v347 = vunpack.c.l.bf16 %v346
  %v348 = vunpack.c.h.bf16 %v346
  %s349 = scalar_lea.vmem %s1, 92
  %v350 = vld [vmem:[%s349] sm:$0xf]
  %v351 = vunpack.c.l.bf16 %v350
  %v352 = vunpack.c.h.bf16 %v350
  %353 = xla_tuple %v347, %v351
  %354 = xla_tuple %353
  %v355 = vmul.f32 %v347, %v351
  %356 = xla_tuple %v355
  %s357 = scalar_lea.vmem %s2, 92
  %v358 = vpack.c.bf16 0.0, %v355
  %359 = vst [vmem:[%s357] sm:$0xf] %v358
  %s360 = scalar_lea.vmem %s0, 96
  %v361 = vld [vmem:[%s360] sm:$0xf]
  %v362 = vunpack.c.l.bf16 %v361
  %v363 = vunpack.c.h.bf16 %v361
  %s364 = scalar_lea.vmem %s1, 96
  %v365 = vld [vmem:[%s364] sm:$0xf]
  %v366 = vunpack.c.l.bf16 %v365
  %v367 = vunpack.c.h.bf16 %v365
  %368 = xla_tuple %v362, %v366
  %369 = xla_tuple %368
  %v370 = vmul.f32 %v362, %v366
  %371 = xla_tuple %v370
  %s372 = scalar_lea.vmem %s2, 96
  %v373 = vpack.c.bf16 0.0, %v370
  %374 = vst [vmem:[%s372] sm:$0xf] %v373
  %s375 = scalar_lea.vmem %s0, 100
  %v376 = vld [vmem:[%s375] sm:$0xf]
  %v377 = vunpack.c.l.bf16 %v376
  %v378 = vunpack.c.h.bf16 %v376
  %s379 = scalar_lea.vmem %s1, 100
  %v380 = vld [vmem:[%s379] sm:$0xf]
  %v381 = vunpack.c.l.bf16 %v380
  %v382 = vunpack.c.h.bf16 %v380
  %383 = xla_tuple %v377, %v381
  %384 = xla_tuple %383
  %v385 = vmul.f32 %v377, %v381
  %386 = xla_tuple %v385
  %s387 = scalar_lea.vmem %s2, 100
  %v388 = vpack.c.bf16 0.0, %v385
  %389 = vst [vmem:[%s387] sm:$0xf] %v388
  %s390 = scalar_lea.vmem %s0, 104
  %v391 = vld [vmem:[%s390] sm:$0xf]
  %v392 = vunpack.c.l.bf16 %v391
  %v393 = vunpack.c.h.bf16 %v391
  %s394 = scalar_lea.vmem %s1, 104
  %v395 = vld [vmem:[%s394] sm:$0xf]
  %v396 = vunpack.c.l.bf16 %v395
  %v397 = vunpack.c.h.bf16 %v395
  %398 = xla_tuple %v392, %v396
  %399 = xla_tuple %398
  %v400 = vmul.f32 %v392, %v396
  %401 = xla_tuple %v400
  %s402 = scalar_lea.vmem %s2, 104
  %v403 = vpack.c.bf16 0.0, %v400
  %404 = vst [vmem:[%s402] sm:$0xf] %v403
  %s405 = scalar_lea.vmem %s0, 108
  %v406 = vld [vmem:[%s405] sm:$0xf]
  %v407 = vunpack.c.l.bf16 %v406
  %v408 = vunpack.c.h.bf16 %v406
  %s409 = scalar_lea.vmem %s1, 108
  %v410 = vld [vmem:[%s409] sm:$0xf]
  %v411 = vunpack.c.l.bf16 %v410
  %v412 = vunpack.c.h.bf16 %v410
  %413 = xla_tuple %v407, %v411
  %414 = xla_tuple %413
  %v415 = vmul.f32 %v407, %v411
  %416 = xla_tuple %v415
  %s417 = scalar_lea.vmem %s2, 108
  %v418 = vpack.c.bf16 0.0, %v415
  %419 = vst [vmem:[%s417] sm:$0xf] %v418
  %s420 = scalar_lea.vmem %s0, 112
  %v421 = vld [vmem:[%s420] sm:$0xf]
  %v422 = vunpack.c.l.bf16 %v421
  %v423 = vunpack.c.h.bf16 %v421
  %s424 = scalar_lea.vmem %s1, 112
  %v425 = vld [vmem:[%s424] sm:$0xf]
  %v426 = vunpack.c.l.bf16 %v425
  %v427 = vunpack.c.h.bf16 %v425
  %428 = xla_tuple %v422, %v426
  %429 = xla_tuple %428
  %v430 = vmul.f32 %v422, %v426
  %431 = xla_tuple %v430
  %s432 = scalar_lea.vmem %s2, 112
  %v433 = vpack.c.bf16 0.0, %v430
  %434 = vst [vmem:[%s432] sm:$0xf] %v433
  %s435 = scalar_lea.vmem %s0, 116
  %v436 = vld [vmem:[%s435] sm:$0xf]
  %v437 = vunpack.c.l.bf16 %v436
  %v438 = vunpack.c.h.bf16 %v436
  %s439 = scalar_lea.vmem %s1, 116
  %v440 = vld [vmem:[%s439] sm:$0xf]
  %v441 = vunpack.c.l.bf16 %v440
  %v442 = vunpack.c.h.bf16 %v440
  %443 = xla_tuple %v437, %v441
  %444 = xla_tuple %443
  %v445 = vmul.f32 %v437, %v441
  %446 = xla_tuple %v445
  %s447 = scalar_lea.vmem %s2, 116
  %v448 = vpack.c.bf16 0.0, %v445
  %449 = vst [vmem:[%s447] sm:$0xf] %v448
  %s450 = scalar_lea.vmem %s0, 120
  %v451 = vld [vmem:[%s450] sm:$0xf]
  %v452 = vunpack.c.l.bf16 %v451
  %v453 = vunpack.c.h.bf16 %v451
  %s454 = scalar_lea.vmem %s1, 120
  %v455 = vld [vmem:[%s454] sm:$0xf]
  %v456 = vunpack.c.l.bf16 %v455
  %v457 = vunpack.c.h.bf16 %v455
  %458 = xla_tuple %v452, %v456
  %459 = xla_tuple %458
  %v460 = vmul.f32 %v452, %v456
  %461 = xla_tuple %v460
  %s462 = scalar_lea.vmem %s2, 120
  %v463 = vpack.c.bf16 0.0, %v460
  %464 = vst [vmem:[%s462] sm:$0xf] %v463
  %s465 = scalar_lea.vmem %s0, 124
  %v466 = vld [vmem:[%s465] sm:$0xf]
  %v467 = vunpack.c.l.bf16 %v466
  %v468 = vunpack.c.h.bf16 %v466
  %s469 = scalar_lea.vmem %s1, 124
  %v470 = vld [vmem:[%s469] sm:$0xf]
  %v471 = vunpack.c.l.bf16 %v470
  %v472 = vunpack.c.h.bf16 %v470
  %473 = xla_tuple %v467, %v471
  %474 = xla_tuple %473
  %v475 = vmul.f32 %v467, %v471
  %476 = xla_tuple %v475
  %s477 = scalar_lea.vmem %s2, 124
  %v478 = vpack.c.bf16 0.0, %v475
  %479 = vst [vmem:[%s477] sm:$0xf] %v478
  %s480 = scalar_lea.vmem %s0, 128
  %v481 = vld [vmem:[%s480] sm:$0xf]
  %v482 = vunpack.c.l.bf16 %v481
  %v483 = vunpack.c.h.bf16 %v481
  %s484 = scalar_lea.vmem %s1, 128
  %v485 = vld [vmem:[%s484] sm:$0xf]
  %v486 = vunpack.c.l.bf16 %v485
  %v487 = vunpack.c.h.bf16 %v485
  %488 = xla_tuple %v482, %v486
  %489 = xla_tuple %488
  %v490 = vmul.f32 %v482, %v486
  %491 = xla_tuple %v490
  %s492 = scalar_lea.vmem %s2, 128
  %v493 = vpack.c.bf16 0.0, %v490
  %494 = vst [vmem:[%s492] sm:$0xf] %v493
  %s495 = scalar_lea.vmem %s0, 132
  %v496 = vld [vmem:[%s495] sm:$0xf]
  %v497 = vunpack.c.l.bf16 %v496
  %v498 = vunpack.c.h.bf16 %v496
  %s499 = scalar_lea.vmem %s1, 132
  %v500 = vld [vmem:[%s499] sm:$0xf]
  %v501 = vunpack.c.l.bf16 %v500
  %v502 = vunpack.c.h.bf16 %v500
  %503 = xla_tuple %v497, %v501
  %504 = xla_tuple %503
  %v505 = vmul.f32 %v497, %v501
  %506 = xla_tuple %v505
  %s507 = scalar_lea.vmem %s2, 132
  %v508 = vpack.c.bf16 0.0, %v505
  %509 = vst [vmem:[%s507] sm:$0xf] %v508
  %s510 = scalar_lea.vmem %s0, 136
  %v511 = vld [vmem:[%s510] sm:$0xf]
  %v512 = vunpack.c.l.bf16 %v511
  %v513 = vunpack.c.h.bf16 %v511
  %s514 = scalar_lea.vmem %s1, 136
  %v515 = vld [vmem:[%s514] sm:$0xf]
  %v516 = vunpack.c.l.bf16 %v515
  %v517 = vunpack.c.h.bf16 %v515
  %518 = xla_tuple %v512, %v516
  %519 = xla_tuple %518
  %v520 = vmul.f32 %v512, %v516
  %521 = xla_tuple %v520
  %s522 = scalar_lea.vmem %s2, 136
  %v523 = vpack.c.bf16 0.0, %v520
  %524 = vst [vmem:[%s522] sm:$0xf] %v523
  %s525 = scalar_lea.vmem %s0, 140
  %v526 = vld [vmem:[%s525] sm:$0xf]
  %v527 = vunpack.c.l.bf16 %v526
  %v528 = vunpack.c.h.bf16 %v526
  %s529 = scalar_lea.vmem %s1, 140
  %v530 = vld [vmem:[%s529] sm:$0xf]
  %v531 = vunpack.c.l.bf16 %v530
  %v532 = vunpack.c.h.bf16 %v530
  %533 = xla_tuple %v527, %v531
  %534 = xla_tuple %533
  %v535 = vmul.f32 %v527, %v531
  %536 = xla_tuple %v535
  %s537 = scalar_lea.vmem %s2, 140
  %v538 = vpack.c.bf16 0.0, %v535
  %539 = vst [vmem:[%s537] sm:$0xf] %v538
  %s540 = scalar_lea.vmem %s0, 144
  %v541 = vld [vmem:[%s540] sm:$0xf]
  %v542 = vunpack.c.l.bf16 %v541
  %v543 = vunpack.c.h.bf16 %v541
  %s544 = scalar_lea.vmem %s1, 144
  %v545 = vld [vmem:[%s544] sm:$0xf]
  %v546 = vunpack.c.l.bf16 %v545
  %v547 = vunpack.c.h.bf16 %v545
  %548 = xla_tuple %v542, %v546
  %549 = xla_tuple %548
  %v550 = vmul.f32 %v542, %v546
  %551 = xla_tuple %v550
  %s552 = scalar_lea.vmem %s2, 144
  %v553 = vpack.c.bf16 0.0, %v550
  %554 = vst [vmem:[%s552] sm:$0xf] %v553
  %s555 = scalar_lea.vmem %s0, 148
  %v556 = vld [vmem:[%s555] sm:$0xf]
  %v557 = vunpack.c.l.bf16 %v556
  %v558 = vunpack.c.h.bf16 %v556
  %s559 = scalar_lea.vmem %s1, 148
  %v560 = vld [vmem:[%s559] sm:$0xf]
  %v561 = vunpack.c.l.bf16 %v560
  %v562 = vunpack.c.h.bf16 %v560
  %563 = xla_tuple %v557, %v561
  %564 = xla_tuple %563
  %v565 = vmul.f32 %v557, %v561
  %566 = xla_tuple %v565
  %s567 = scalar_lea.vmem %s2, 148
  %v568 = vpack.c.bf16 0.0, %v565
  %569 = vst [vmem:[%s567] sm:$0xf] %v568
  %s570 = scalar_lea.vmem %s0, 152
  %v571 = vld [vmem:[%s570] sm:$0xf]
  %v572 = vunpack.c.l.bf16 %v571
  %v573 = vunpack.c.h.bf16 %v571
  %s574 = scalar_lea.vmem %s1, 152
  %v575 = vld [vmem:[%s574] sm:$0xf]
  %v576 = vunpack.c.l.bf16 %v575
  %v577 = vunpack.c.h.bf16 %v575
  %578 = xla_tuple %v572, %v576
  %579 = xla_tuple %578
  %v580 = vmul.f32 %v572, %v576
  %581 = xla_tuple %v580
  %s582 = scalar_lea.vmem %s2, 152
  %v583 = vpack.c.bf16 0.0, %v580
  %584 = vst [vmem:[%s582] sm:$0xf] %v583
  %s585 = scalar_lea.vmem %s0, 156
  %v586 = vld [vmem:[%s585] sm:$0xf]
  %v587 = vunpack.c.l.bf16 %v586
  %v588 = vunpack.c.h.bf16 %v586
  %s589 = scalar_lea.vmem %s1, 156
  %v590 = vld [vmem:[%s589] sm:$0xf]
  %v591 = vunpack.c.l.bf16 %v590
  %v592 = vunpack.c.h.bf16 %v590
  %593 = xla_tuple %v587, %v591
  %594 = xla_tuple %593
  %v595 = vmul.f32 %v587, %v591
  %596 = xla_tuple %v595
  %s597 = scalar_lea.vmem %s2, 156
  %v598 = vpack.c.bf16 0.0, %v595
  %599 = vst [vmem:[%s597] sm:$0xf] %v598
  %s600 = scalar_lea.vmem %s0, 160
  %v601 = vld [vmem:[%s600] sm:$0xf]
  %v602 = vunpack.c.l.bf16 %v601
  %v603 = vunpack.c.h.bf16 %v601
  %s604 = scalar_lea.vmem %s1, 160
  %v605 = vld [vmem:[%s604] sm:$0xf]
  %v606 = vunpack.c.l.bf16 %v605
  %v607 = vunpack.c.h.bf16 %v605
  %608 = xla_tuple %v602, %v606
  %609 = xla_tuple %608
  %v610 = vmul.f32 %v602, %v606
  %611 = xla_tuple %v610
  %s612 = scalar_lea.vmem %s2, 160
  %v613 = vpack.c.bf16 0.0, %v610
  %614 = vst [vmem:[%s612] sm:$0xf] %v613
  %s615 = scalar_lea.vmem %s0, 164
  %v616 = vld [vmem:[%s615] sm:$0xf]
  %v617 = vunpack.c.l.bf16 %v616
  %v618 = vunpack.c.h.bf16 %v616
  %s619 = scalar_lea.vmem %s1, 164
  %v620 = vld [vmem:[%s619] sm:$0xf]
  %v621 = vunpack.c.l.bf16 %v620
  %v622 = vunpack.c.h.bf16 %v620
  %623 = xla_tuple %v617, %v621
  %624 = xla_tuple %623
  %v625 = vmul.f32 %v617, %v621
  %626 = xla_tuple %v625
  %s627 = scalar_lea.vmem %s2, 164
  %v628 = vpack.c.bf16 0.0, %v625
  %629 = vst [vmem:[%s627] sm:$0xf] %v628
  %s630 = scalar_lea.vmem %s0, 168
  %v631 = vld [vmem:[%s630] sm:$0xf]
  %v632 = vunpack.c.l.bf16 %v631
  %v633 = vunpack.c.h.bf16 %v631
  %s634 = scalar_lea.vmem %s1, 168
  %v635 = vld [vmem:[%s634] sm:$0xf]
  %v636 = vunpack.c.l.bf16 %v635
  %v637 = vunpack.c.h.bf16 %v635
  %638 = xla_tuple %v632, %v636
  %639 = xla_tuple %638
  %v640 = vmul.f32 %v632, %v636
  %641 = xla_tuple %v640
  %s642 = scalar_lea.vmem %s2, 168
  %v643 = vpack.c.bf16 0.0, %v640
  %644 = vst [vmem:[%s642] sm:$0xf] %v643
  %s645 = scalar_lea.vmem %s0, 172
  %v646 = vld [vmem:[%s645] sm:$0xf]
  %v647 = vunpack.c.l.bf16 %v646
  %v648 = vunpack.c.h.bf16 %v646
  %s649 = scalar_lea.vmem %s1, 172
  %v650 = vld [vmem:[%s649] sm:$0xf]
  %v651 = vunpack.c.l.bf16 %v650
  %v652 = vunpack.c.h.bf16 %v650
  %653 = xla_tuple %v647, %v651
  %654 = xla_tuple %653
  %v655 = vmul.f32 %v647, %v651
  %656 = xla_tuple %v655
  %s657 = scalar_lea.vmem %s2, 172
  %v658 = vpack.c.bf16 0.0, %v655
  %659 = vst [vmem:[%s657] sm:$0xf] %v658
  %s660 = scalar_lea.vmem %s0, 176
  %v661 = vld [vmem:[%s660] sm:$0xf]
  %v662 = vunpack.c.l.bf16 %v661
  %v663 = vunpack.c.h.bf16 %v661
  %s664 = scalar_lea.vmem %s1, 176
  %v665 = vld [vmem:[%s664] sm:$0xf]
  %v666 = vunpack.c.l.bf16 %v665
  %v667 = vunpack.c.h.bf16 %v665
  %668 = xla_tuple %v662, %v666
  %669 = xla_tuple %668
  %v670 = vmul.f32 %v662, %v666
  %671 = xla_tuple %v670
  %s672 = scalar_lea.vmem %s2, 176
  %v673 = vpack.c.bf16 0.0, %v670
  %674 = vst [vmem:[%s672] sm:$0xf] %v673
  %s675 = scalar_lea.vmem %s0, 180
  %v676 = vld [vmem:[%s675] sm:$0xf]
  %v677 = vunpack.c.l.bf16 %v676
  %v678 = vunpack.c.h.bf16 %v676
  %s679 = scalar_lea.vmem %s1, 180
  %v680 = vld [vmem:[%s679] sm:$0xf]
  %v681 = vunpack.c.l.bf16 %v680
  %v682 = vunpack.c.h.bf16 %v680
  %683 = xla_tuple %v677, %v681
  %684 = xla_tuple %683
  %v685 = vmul.f32 %v677, %v681
  %686 = xla_tuple %v685
  %s687 = scalar_lea.vmem %s2, 180
  %v688 = vpack.c.bf16 0.0, %v685
  %689 = vst [vmem:[%s687] sm:$0xf] %v688
  %s690 = scalar_lea.vmem %s0, 184
  %v691 = vld [vmem:[%s690] sm:$0xf]
  %v692 = vunpack.c.l.bf16 %v691
  %v693 = vunpack.c.h.bf16 %v691
  %s694 = scalar_lea.vmem %s1, 184
  %v695 = vld [vmem:[%s694] sm:$0xf]
  %v696 = vunpack.c.l.bf16 %v695
  %v697 = vunpack.c.h.bf16 %v695
  %698 = xla_tuple %v692, %v696
  %699 = xla_tuple %698
  %v700 = vmul.f32 %v692, %v696
  %701 = xla_tuple %v700
  %s702 = scalar_lea.vmem %s2, 184
  %v703 = vpack.c.bf16 0.0, %v700
  %704 = vst [vmem:[%s702] sm:$0xf] %v703
  %s705 = scalar_lea.vmem %s0, 188
  %v706 = vld [vmem:[%s705] sm:$0xf]
  %v707 = vunpack.c.l.bf16 %v706
  %v708 = vunpack.c.h.bf16 %v706
  %s709 = scalar_lea.vmem %s1, 188
  %v710 = vld [vmem:[%s709] sm:$0xf]
  %v711 = vunpack.c.l.bf16 %v710
  %v712 = vunpack.c.h.bf16 %v710
  %713 = xla_tuple %v707, %v711
  %714 = xla_tuple %713
  %v715 = vmul.f32 %v707, %v711
  %716 = xla_tuple %v715
  %s717 = scalar_lea.vmem %s2, 188
  %v718 = vpack.c.bf16 0.0, %v715
  %719 = vst [vmem:[%s717] sm:$0xf] %v718

// kernel: link_predictor_forward.1
$region0: #{link_predictor_forward.1}
  #allocation0 [shape = 'u32[]', space=smem, size = 0x4, offset = 0x4, fixed_abs, tag = 'smem constant byte address 0x4 - core index']
  #allocation1 [shape = 'u32[72,128]{1,0:T(1,128)}', space=vmem, size = 0x9000, scoped, tag = 'internal scratch']
  #allocation2 [shape = 'f32[1,1]{1,0:T(1,128)S(1)}', space=vmem, size = 0x200, scoped, tag = 'scoped memory for link_predictor_forward.1']
  %s0 = inlined_call_operand.vmem [shape: bf16[384,64], index: 0, kind: input, shape index: {}]
  %s1 = inlined_call_operand.vmem [shape: bf16[64,64], index: 1, kind: input, shape index: {}]
  %s2 = inlined_call_operand.vmem [shape: f32[1,64], index: 2, kind: input, shape index: {}]
  %s3 = inlined_call_operand.vmem [shape: bf16[64,64], index: 3, kind: input, shape index: {}]
  %s4 = inlined_call_operand.vmem [shape: f32[1,64], index: 4, kind: input, shape index: {}]
  %s5 = inlined_call_operand.vmem [shape: f32[1,64], index: 5, kind: input, shape index: {}]
  %s6 = inlined_call_operand.<no memory space> [shape: f32[1,1], index: 6, kind: input, shape index: {}]
  %s7 = inlined_call_operand.hbm [shape: f32[3,1,128], index: 7, kind: output, shape index: {}]
  %s8 = sld [smem:[#allocation0]]
  $region61: #{link_predictor_forward.1} parent=0
    _
  %s10 = ssub.s32 1, %s8
  %s11 = scalar_select 0, %s10, %s8
  %v12 = vstv %s6
  %13 = vst [vmem:[#allocation2] sm:$0x1] %v12
  $region1: #{link_predictor_forward.1} parent=0
    #allocation3 [shape = 'u8[1024]{0}', space=vmem, size = 0x400, scoped, tag = 'output window, operand 0']
    #allocation4 [shape = 's32[2]{0}', space=sflag, size = 0x8, scoped, tag = 'scoped memory for link_predictor_forward.1']
    %14 = vsyncpa [#allocation4], 0
    %s15 = scalar_lea.sflag [#allocation4], 1
    %16 = vsyncpa %s15, 0
    loop: start=0, step=1, limit=5
    $region2: #{link_predictor_forward.1} parent=1 // loop_pre_header
      _
    $region3: #{link_predictor_forward.1} parent=1 // loop_header
      %s18 = sphi 0, %s22
      %p19 = scmp.ge.s32.totalorder %s18, 5
      %s28 = sphi 0, %s30
      %s31 = sphi 0, %s28
      %s32 = sphi 0, %s31
      %s48 = sphi 0, %s32
      %s52 = sphi 0, %s52
      %s54 = sphi 0, %s52
      %s55 = sphi 0, %s54
      %s69 = sphi 0, %s55
      %s73 = sphi 0, %s73
      %s75 = sphi 0, %s73
      %s76 = sphi 0, %s75
      %s90 = sphi 0, %s76
      %s94 = sphi 0, %s94
      %s96 = sphi 0, %s94
      %s97 = sphi 0, %s96
      %s111 = sphi 0, %s97
      %s115 = sphi 0, %s115
      %s117 = sphi 0, %s115
      %s118 = sphi 0, %s117
      %s132 = sphi 0, %s118
      %s136 = sphi 0, %s136
      %s138 = sphi 0, %s136
      %s139 = sphi 0, %s138
      %s153 = sphi 0, %s139
      %s157 = sphi 0, %s157
      %s159 = sphi 0, %s157
      %s160 = sphi 0, %s159
      %s174 = sphi 0, %s160
      %s180 = sphi 0, %s182
      %s183 = sphi 0, %s180
      %s184 = sphi 0, %s183
      %s200 = sphi 0, %s184
    $region4: #{link_predictor_forward.1} parent=1 // loop_header_branch
      %21 = sbr.rel (%p19) target = $region8
    $region5: #{link_predictor_forward.1} parent=1 // loop_body
      %s23 = ssub.s32 %s18, 1
      %s24 = ssub.s32 %s18, 2
      %s25 = sadd.s32 %s18, 1
      %s26 = ssub.s32 %s18, %s25
      %p27 = scmp.eq.s32.totalorder %s26, 0
      %s29 = sadd.s32 %s28, 1
      %s30 = scalar_select %p27, %s28, %s29
      %p33 = pneg %p27
      %p34 = scmp.eq.s32.totalorder %s18, 2
      %p35 = por %p33, %p34
      %p36 = scmp.ne.s32.totalorder %s28, %s31
      %p37 = scmp.eq.s32.totalorder %s18, 0
      %p38 = por %p36, %p37
      %p39 = scmp.ne.s32.totalorder %s28, %s31
      %p40 = scmp.eq.s32.totalorder %s23, 2
      %p41 = por %p39, %p40
      %p42 = scmp.ne.s32.totalorder %s31, %s32
      %p43 = scmp.eq.s32.totalorder %s23, 0
      %p44 = por %p42, %p43
      %p45 = scmp.ne.s32.totalorder %s31, %s32
      %p46 = scmp.eq.s32.totalorder %s24, 2
      %p47 = por %p45, %p46
      %p49 = scmp.ne.s32.totalorder %s32, %s48
      %p50 = scmp.eq.s32.totalorder %s24, 0
      %p51 = por %p49, %p50
      %s53 = sadd.s32 %s52, 1
      %p56 = scmp.eq.s32.totalorder %s18, 2
      %p57 = scmp.ne.s32.totalorder %s52, %s54
      %p58 = scmp.eq.s32.totalorder %s18, 0
      %p59 = por %p57, %p58
      %p60 = scmp.ne.s32.totalorder %s52, %s54
      %p61 = scmp.eq.s32.totalorder %s23, 2
      %p62 = por %p60, %p61
      %p63 = scmp.ne.s32.totalorder %s54, %s55
      %p64 = scmp.eq.s32.totalorder %s23, 0
      %p65 = por %p63, %p64
      %p66 = scmp.ne.s32.totalorder %s54, %s55
      %p67 = scmp.eq.s32.totalorder %s24, 2
      %p68 = por %p66, %p67
      %p70 = scmp.ne.s32.totalorder %s55, %s69
      %p71 = scmp.eq.s32.totalorder %s24, 0
      %p72 = por %p70, %p71
      %s74 = sadd.s32 %s73, 1
      %p77 = scmp.eq.s32.totalorder %s18, 2
      %p78 = scmp.ne.s32.totalorder %s73, %s75
      %p79 = scmp.eq.s32.totalorder %s18, 0
      %p80 = por %p78, %p79
      %p81 = scmp.ne.s32.totalorder %s73, %s75
      %p82 = scmp.eq.s32.totalorder %s23, 2
      %p83 = por %p81, %p82
      %p84 = scmp.ne.s32.totalorder %s75, %s76
      %p85 = scmp.eq.s32.totalorder %s23, 0
      %p86 = por %p84, %p85
      %p87 = scmp.ne.s32.totalorder %s75, %s76
      %p88 = scmp.eq.s32.totalorder %s24, 2
      %p89 = por %p87, %p88
      %p91 = scmp.ne.s32.totalorder %s76, %s90
      %p92 = scmp.eq.s32.totalorder %s24, 0
      %p93 = por %p91, %p92
      %s95 = sadd.s32 %s94, 1
      %p98 = scmp.eq.s32.totalorder %s18, 2
      %p99 = scmp.ne.s32.totalorder %s94, %s96
      %p100 = scmp.eq.s32.totalorder %s18, 0
      %p101 = por %p99, %p100
      %p102 = scmp.ne.s32.totalorder %s94, %s96
      %p103 = scmp.eq.s32.totalorder %s23, 2
      %p104 = por %p102, %p103
      %p105 = scmp.ne.s32.totalorder %s96, %s97
      %p106 = scmp.eq.s32.totalorder %s23, 0
      %p107 = por %p105, %p106
      %p108 = scmp.ne.s32.totalorder %s96, %s97
      %p109 = scmp.eq.s32.totalorder %s24, 2
      %p110 = por %p108, %p109
      %p112 = scmp.ne.s32.totalorder %s97, %s111
      %p113 = scmp.eq.s32.totalorder %s24, 0
      %p114 = por %p112, %p113
      %s116 = sadd.s32 %s115, 1
      %p119 = scmp.eq.s32.totalorder %s18, 2
      %p120 = scmp.ne.s32.totalorder %s115, %s117
      %p121 = scmp.eq.s32.totalorder %s18, 0
      %p122 = por %p120, %p121
      %p123 = scmp.ne.s32.totalorder %s115, %s117
      %p124 = scmp.eq.s32.totalorder %s23, 2
      %p125 = por %p123, %p124
      %p126 = scmp.ne.s32.totalorder %s117, %s118
      %p127 = scmp.eq.s32.totalorder %s23, 0
      %p128 = por %p126, %p127
      %p129 = scmp.ne.s32.totalorder %s117, %s118
      %p130 = scmp.eq.s32.totalorder %s24, 2
      %p131 = por %p129, %p130
      %p133 = scmp.ne.s32.totalorder %s118, %s132
      %p134 = scmp.eq.s32.totalorder %s24, 0
      %p135 = por %p133, %p134
      %s137 = sadd.s32 %s136, 1
      %p140 = scmp.eq.s32.totalorder %s18, 2
      %p141 = scmp.ne.s32.totalorder %s136, %s138
      %p142 = scmp.eq.s32.totalorder %s18, 0
      %p143 = por %p141, %p142
      %p144 = scmp.ne.s32.totalorder %s136, %s138
      %p145 = scmp.eq.s32.totalorder %s23, 2
      %p146 = por %p144, %p145
      %p147 = scmp.ne.s32.totalorder %s138, %s139
      %p148 = scmp.eq.s32.totalorder %s23, 0
      %p149 = por %p147, %p148
      %p150 = scmp.ne.s32.totalorder %s138, %s139
      %p151 = scmp.eq.s32.totalorder %s24, 2
      %p152 = por %p150, %p151
      %p154 = scmp.ne.s32.totalorder %s139, %s153
      %p155 = scmp.eq.s32.totalorder %s24, 0
      %p156 = por %p154, %p155
      %s158 = sadd.s32 %s157, 1
      %p161 = scmp.eq.s32.totalorder %s18, 2
      %p162 = scmp.ne.s32.totalorder %s157, %s159
      %p163 = scmp.eq.s32.totalorder %s18, 0
      %p164 = por %p162, %p163
      %p165 = scmp.ne.s32.totalorder %s157, %s159
      %p166 = scmp.eq.s32.totalorder %s23, 2
      %p167 = por %p165, %p166
      %p168 = scmp.ne.s32.totalorder %s159, %s160
      %p169 = scmp.eq.s32.totalorder %s23, 0
      %p170 = por %p168, %p169
      %p171 = scmp.ne.s32.totalorder %s159, %s160
      %p172 = scmp.eq.s32.totalorder %s24, 2
      %p173 = por %p171, %p172
      %p175 = scmp.ne.s32.totalorder %s160, %s174
      %p176 = scmp.eq.s32.totalorder %s24, 0
      %p177 = por %p175, %p176
      %s178 = ssub.s32 %s18, %s25
      %p179 = scmp.eq.s32.totalorder %s178, 0
      %s181 = sadd.s32 %s180, 1
      %s182 = scalar_select %p179, %s180, %s181
      %p185 = pneg %p179
      %p186 = scmp.eq.s32.totalorder %s18, 2
      %p187 = por %p185, %p186
      %p188 = scmp.ne.s32.totalorder %s180, %s183
      %p189 = scmp.eq.s32.totalorder %s18, 0
      %p190 = por %p188, %p189
      %p191 = scmp.ne.s32.totalorder %s180, %s183
      %p192 = scmp.eq.s32.totalorder %s23, 2
      %p193 = por %p191, %p192
      %p194 = scmp.ne.s32.totalorder %s183, %s184
      %p195 = scmp.eq.s32.totalorder %s23, 0
      %p196 = por %p194, %p195
      %p197 = scmp.ne.s32.totalorder %s183, %s184
      %p198 = scmp.eq.s32.totalorder %s24, 2
      %p199 = por %p197, %p198
      %p201 = scmp.ne.s32.totalorder %s184, %s200
      %p202 = scmp.eq.s32.totalorder %s24, 0
      %p203 = por %p201, %p202
      %p204 = scmp.le.s32.totalorder 1, %s18
      %p205 = scmp.lt.s32.totalorder %s18, 4
      %p206 = pnand %p204, %p205
      %p207 = pneg %p206
      // Predicated region
      $region9: #{link_predictor_forward.1} parent=5 // pred_check
        _
      $region10: #{link_predictor_forward.1} parent=5 // pred_check_branch
        %209 = sbr.rel (%p206) target = $region12
      $region11: #{link_predictor_forward.1} parent=5 // pred_region
        %s210 = ssub.s32 %s18, 1
        // Predicated region
        $region13: #{link_predictor_forward.1} parent=11 // pred_check
          %p211 = pneg %p65
        $region14: #{link_predictor_forward.1} parent=11 // pred_check_branch
          %213 = sbr.rel (%p211) target = $region16
        $region15: #{link_predictor_forward.1} parent=11 // pred_region
          _
        $region16: #{link_predictor_forward.1} parent=11 // pred_fallthru
          _
        // Predicated region
        $region17: #{link_predictor_forward.1} parent=11 // pred_check
          %p214 = pneg %p86
        $region18: #{link_predictor_forward.1} parent=11 // pred_check_branch
          %216 = sbr.rel (%p214) target = $region20
        $region19: #{link_predictor_forward.1} parent=11 // pred_region
          _
        $region20: #{link_predictor_forward.1} parent=11 // pred_fallthru
          _
        // Predicated region
        $region21: #{link_predictor_forward.1} parent=11 // pred_check
          %p217 = pneg %p107
        $region22: #{link_predictor_forward.1} parent=11 // pred_check_branch
          %219 = sbr.rel (%p217) target = $region24
        $region23: #{link_predictor_forward.1} parent=11 // pred_region
          _
        $region24: #{link_predictor_forward.1} parent=11 // pred_fallthru
          _
        // Predicated region
        $region25: #{link_predictor_forward.1} parent=11 // pred_check
          %p220 = pneg %p128
        $region26: #{link_predictor_forward.1} parent=11 // pred_check_branch
          %222 = sbr.rel (%p220) target = $region28
        $region27: #{link_predictor_forward.1} parent=11 // pred_region
          _
        $region28: #{link_predictor_forward.1} parent=11 // pred_fallthru
          _
        // Predicated region
        $region29: #{link_predictor_forward.1} parent=11 // pred_check
          %p223 = pneg %p149
        $region30: #{link_predictor_forward.1} parent=11 // pred_check_branch
          %225 = sbr.rel (%p223) target = $region32
        $region31: #{link_predictor_forward.1} parent=11 // pred_region
          _
        $region32: #{link_predictor_forward.1} parent=11 // pred_fallthru
          _
        // Predicated region
        $region33: #{link_predictor_forward.1} parent=11 // pred_check
          %p226 = pneg %p170
        $region34: #{link_predictor_forward.1} parent=11 // pred_check_branch
          %228 = sbr.rel (%p226) target = $region36
        $region35: #{link_predictor_forward.1} parent=11 // pred_region
          _
        $region36: #{link_predictor_forward.1} parent=11 // pred_fallthru
          _
      $region12: #{link_predictor_forward.1} parent=5 // pred_fallthru
        _
      %p229 = scmp.lt.s32.totalorder %s18, 3
      // Predicated region
      $region37: #{link_predictor_forward.1} parent=5 // pred_check
        %p230 = pneg %p229
      $region38: #{link_predictor_forward.1} parent=5 // pred_check_branch
        %232 = sbr.rel (%p230) target = $region40
      $region39: #{link_predictor_forward.1} parent=5 // pred_region
        // Predicated region
        $region41: #{link_predictor_forward.1} parent=39 // pred_check
          %p233 = pneg %p38
        $region42: #{link_predictor_forward.1} parent=39 // pred_check_branch
          %235 = sbr.rel (%p233) target = $region44
        $region43: #{link_predictor_forward.1} parent=39 // pred_region
          %s236 = smul.u32 16, %s18
          %p237 = scmp.lt.s32.totalorder %s236, 47
          %s238 = scalar_select %p237, %s236, 47
          %s239 = smul.addr %s238, 4
          %s240 = scalar_lea.vmem %s0, %s239
          %s241 = smul.u32 16, %s18
        $region44: #{link_predictor_forward.1} parent=39 // pred_fallthru
          _
      $region40: #{link_predictor_forward.1} parent=5 // pred_fallthru
        _
      %p242 = scmp.le.s32.totalorder 1, %s18
      %p243 = scmp.lt.s32.totalorder %s18, 4
      %p244 = pnand %p242, %p243
      %p245 = pneg %p244
      // Predicated region
      $region45: #{link_predictor_forward.1} parent=5 // pred_check
        _
      $region46: #{link_predictor_forward.1} parent=5 // pred_check_branch
        %247 = sbr.rel (%p244) target = $region48
      $region47: #{link_predictor_forward.1} parent=5 // pred_region
        %s248 = ssub.s32 %s18, 1
        %s249 = smul.u32 16, %s23
        %p250 = scmp.lt.s32.totalorder %s249, 47
        %s251 = scalar_select %p250, %s249, 47
        %s252 = smul.addr %s251, 4
        %s253 = scalar_lea.vmem %s0, %s252
        %p254 = pneg %p44
        %p255 = pneg %p41
        %p256 = pneg %p65
        %p257 = pneg %p62
        %p258 = pneg %p86
        %p259 = pneg %p83
        %p260 = pneg %p107
        %p261 = pneg %p104
        %p262 = pneg %p128
        %p263 = pneg %p125
        %p264 = pneg %p149
        %p265 = pneg %p146
        %p266 = pneg %p170
        %p267 = pneg %p167
        %p268 = pneg %p196
        %p269 = pneg %p193
        %s270 = sand.u32 %s183, 1
        %s271 = scalar_lea.sflag [#allocation4], %s270
        %s272 = sand.u32 %s183, 1
        %s273 = scalar_lea.vmem [#allocation3], %s272
        %s274 = smul.u32 16, %s23
        %p275 = scmp.lt.s32.totalorder %s274, 47
        %s276 = scalar_select %p275, %s274, 47
        %s277 = smul.addr %s276, 4
        %s278 = scalar_lea.vmem %s0, %s277
        %s279 = smul.u32 16, %s23
        %v281 = vld [vmem:[%s278] sm:$0xf]
        %v282 = vld [vmem:[%s278 + $0x4] sm:$0xf]
        %v283 = vld [vmem:[%s278 + $0x8] sm:$0xf]
        %v284 = vld [vmem:[%s278 + $0xc] sm:$0xf]
        %v285 = vld [vmem:[%s278 + $0x10] sm:$0xf]
        %v286 = vld [vmem:[%s278 + $0x14] sm:$0xf]
        %v287 = vld [vmem:[%s278 + $0x18] sm:$0xf]
        %v288 = vld [vmem:[%s278 + $0x1c] sm:$0xf]
        %v289 = vld [vmem:[%s278 + $0x20] sm:$0xf]
        %v290 = vld [vmem:[%s278 + $0x24] sm:$0xf]
        %v291 = vld [vmem:[%s278 + $0x28] sm:$0xf]
        %v292 = vld [vmem:[%s278 + $0x2c] sm:$0xf]
        %v293 = vld [vmem:[%s278 + $0x30] sm:$0xf]
        %v294 = vld [vmem:[%s278 + $0x34] sm:$0xf]
        %v295 = vld [vmem:[%s278 + $0x38] sm:$0xf]
        %v296 = vld [vmem:[%s278 + $0x3c] sm:$0xf]
        %v297 = vld [vmem:[%s1] sm:$0xf]
        %v298 = vld [vmem:[%s1 + $0x4] sm:$0xf]
        %v299 = vld [vmem:[%s1 + $0x8] sm:$0xf]
        %v300 = vld [vmem:[%s1 + $0xc] sm:$0xf]
        %v301 = vld [vmem:[%s1 + $0x10] sm:$0xf]
        %v302 = vld [vmem:[%s1 + $0x14] sm:$0xf]
        %v303 = vld [vmem:[%s1 + $0x18] sm:$0xf]
        %v304 = vld [vmem:[%s1 + $0x1c] sm:$0xf]
        %v305 = vld [vmem:[%s2] sm:$0x1]
        %v307 = vperm.slane %v305, 0
        %v325 = vunpack.c.l.b16 %v281
        %v326 = vunpack.c.l.b16 %v282
        %v327 = vunpack.c.l.b16 %v283
        %v328 = vunpack.c.l.b16 %v284
        %v329 = vunpack.c.l.b16 %v285
        %v330 = vunpack.c.l.b16 %v286
        %v331 = vunpack.c.l.b16 %v287
        %v332 = vunpack.c.l.b16 %v288
        %v333 = vunpack.c.l.b16 %v289
        %v334 = vunpack.c.l.b16 %v290
        %v335 = vunpack.c.l.b16 %v291
        %v336 = vunpack.c.l.b16 %v292
        %v337 = vunpack.c.l.b16 %v293
        %v338 = vunpack.c.l.b16 %v294
        %v339 = vunpack.c.l.b16 %v295
        %v340 = vunpack.c.l.b16 %v296
        %v341 = vpack.c.b16 %v326, %v325
        %v342 = vpack.c.b16 %v328, %v327
        %v343 = vpack.c.b16 %v330, %v329
        %v344 = vpack.c.b16 %v332, %v331
        %v345 = vpack.c.b16 %v334, %v333
        %v346 = vpack.c.b16 %v336, %v335
        %v347 = vpack.c.b16 %v338, %v337
        %v348 = vpack.c.b16 %v340, %v339
        %v357 = vunpack.c.l.b16 %v297
        %v358 = vunpack.c.l.b16 %v298
        %v359 = vunpack.c.l.b16 %v299
        %v360 = vunpack.c.l.b16 %v300
        %v361 = vunpack.c.l.b16 %v301
        %v362 = vunpack.c.l.b16 %v302
        %v363 = vunpack.c.l.b16 %v303
        %v364 = vunpack.c.l.b16 %v304
        %v365 = vpack.c.b16 %v358, %v357
        %v366 = vpack.c.b16 %v360, %v359
        %v367 = vpack.c.b16 %v362, %v361
        %v368 = vpack.c.b16 %v364, %v363
        %vm373 = vcmask 523264
        %v375 = vsel %vm373, %v341, 0
        %v378 = vsel %vm373, %v342, 0
        %v381 = vsel %vm373, %v343, 0
        %v384 = vsel %vm373, %v344, 0
        %v387 = vsel %vm373, %v345, 0
        %v390 = vsel %vm373, %v346, 0
        %v393 = vsel %vm373, %v347, 0
        %v396 = vsel %vm373, %v348, 0
        %398 = vmatpush.bf16.msra.mxu0 0
        %399 = vmatpush.bf16.msra.mxu0 0
        %400 = vmatpush.bf16.msra.mxu0 0
        %401 = vmatpush.bf16.msra.mxu0 0
        %402 = vmatpush.bf16.msra.mxu0 %v368
        %403 = vmatpush.bf16.msra.mxu0 %v367
        %404 = vmatpush.bf16.msra.mxu0 %v366
        %405 = vmatpush.bf16.msra.mxu0 %v365
        %406 = vmatmul.bf16.gmra.mxu0 %v375
        %v407 = vpop.f32.mrf.mxu0
        %v408 = vadd.f32 %v307, %v407
        %v409 = vpop.f32.mrf.mxu0
        %v410 = vadd.f32 %v307, %v409
        %411 = vmatmul.bf16.gmra.mxu0 %v378
        %v412 = vpop.f32.mrf.mxu0
        %v413 = vadd.f32 %v307, %v412
        %v414 = vpop.f32.mrf.mxu0
        %v415 = vadd.f32 %v307, %v414
        %416 = vmatmul.bf16.gmra.mxu0 %v381
        %v417 = vpop.f32.mrf.mxu0
        %v418 = vadd.f32 %v307, %v417
        %v419 = vpop.f32.mrf.mxu0
        %v420 = vadd.f32 %v307, %v419
        %421 = vmatmul.bf16.gmra.mxu0 %v384
        %v422 = vpop.f32.mrf.mxu0
        %v423 = vadd.f32 %v307, %v422
        %v424 = vpop.f32.mrf.mxu0
        %v425 = vadd.f32 %v307, %v424
        %426 = vmatmul.bf16.gmra.mxu0 %v387
        %v427 = vpop.f32.mrf.mxu0
        %v428 = vadd.f32 %v307, %v427
        %v429 = vpop.f32.mrf.mxu0
        %v430 = vadd.f32 %v307, %v429
        %431 = vmatmul.bf16.gmra.mxu0 %v390
        %v432 = vpop.f32.mrf.mxu0
        %v433 = vadd.f32 %v307, %v432
        %v434 = vpop.f32.mrf.mxu0
        %v435 = vadd.f32 %v307, %v434
        %436 = vmatmul.bf16.gmra.mxu0 %v393
        %v437 = vpop.f32.mrf.mxu0
        %v438 = vadd.f32 %v307, %v437
        %v439 = vpop.f32.mrf.mxu0
        %v440 = vadd.f32 %v307, %v439
        %441 = vmatmul.bf16.gmra.mxu0 %v396
        %v442 = vpop.f32.mrf.mxu0
        %v443 = vadd.f32 %v307, %v442
        %v444 = vpop.f32.mrf.mxu0
        %v445 = vadd.f32 %v307, %v444
        %446 = vdwg.mxu0
        %v447 = vmax.f32 %v408, 0.0
        %v448 = vmax.f32 %v410, 0.0
        %v449 = vmax.f32 %v413, 0.0
        %v450 = vmax.f32 %v415, 0.0
        %v451 = vmax.f32 %v418, 0.0
        %v452 = vmax.f32 %v420, 0.0
        %v453 = vmax.f32 %v423, 0.0
        %v454 = vmax.f32 %v425, 0.0
        %v455 = vmax.f32 %v428, 0.0
        %v456 = vmax.f32 %v430, 0.0
        %v457 = vmax.f32 %v433, 0.0
        %v458 = vmax.f32 %v435, 0.0
        %v459 = vmax.f32 %v438, 0.0
        %v460 = vmax.f32 %v440, 0.0
        %v461 = vmax.f32 %v443, 0.0
        %v462 = vmax.f32 %v445, 0.0
        %v463 = vld [vmem:[%s3] sm:$0xf]
        %v464 = vld [vmem:[%s3 + $0x4] sm:$0xf]
        %v465 = vld [vmem:[%s3 + $0x8] sm:$0xf]
        %v466 = vld [vmem:[%s3 + $0xc] sm:$0xf]
        %v467 = vld [vmem:[%s3 + $0x10] sm:$0xf]
        %v468 = vld [vmem:[%s3 + $0x14] sm:$0xf]
        %v469 = vld [vmem:[%s3 + $0x18] sm:$0xf]
        %v470 = vld [vmem:[%s3 + $0x1c] sm:$0xf]
        %v471 = vld [vmem:[%s4] sm:$0x1]
        %v472 = vpack.c.bf16 %v448, %v447
        %v473 = vpack.c.bf16 %v450, %v449
        %v474 = vpack.c.bf16 %v452, %v451
        %v475 = vpack.c.bf16 %v454, %v453
        %v476 = vpack.c.bf16 %v456, %v455
        %v477 = vpack.c.bf16 %v458, %v457
        %v478 = vpack.c.bf16 %v460, %v459
        %v479 = vpack.c.bf16 %v462, %v461
        %v481 = vperm.slane %v471, 0
        %v491 = vunpack.c.l.b16 %v463
        %v492 = vunpack.c.l.b16 %v464
        %v493 = vunpack.c.l.b16 %v465
        %v494 = vunpack.c.l.b16 %v466
        %v495 = vunpack.c.l.b16 %v467
        %v496 = vunpack.c.l.b16 %v468
        %v497 = vunpack.c.l.b16 %v469
        %v498 = vunpack.c.l.b16 %v470
        %v499 = vpack.c.b16 %v492, %v491
        %v500 = vpack.c.b16 %v494, %v493
        %v501 = vpack.c.b16 %v496, %v495
        %v502 = vpack.c.b16 %v498, %v497
        %v508 = vsel %vm373, %v472, 0
        %v511 = vsel %vm373, %v473, 0
        %v514 = vsel %vm373, %v474, 0
        %v517 = vsel %vm373, %v475, 0
        %v520 = vsel %vm373, %v476, 0
        %v523 = vsel %vm373, %v477, 0
        %v526 = vsel %vm373, %v478, 0
        %v529 = vsel %vm373, %v479, 0
        %531 = vmatpush.bf16.msra.mxu0 0
        %532 = vmatpush.bf16.msra.mxu0 0
        %533 = vmatpush.bf16.msra.mxu0 0
        %534 = vmatpush.bf16.msra.mxu0 0
        %535 = vmatpush.bf16.msra.mxu0 %v502
        %536 = vmatpush.bf16.msra.mxu0 %v501
        %537 = vmatpush.bf16.msra.mxu0 %v500
        %538 = vmatpush.bf16.msra.mxu0 %v499
        %539 = vmatmul.bf16.gmra.mxu0 %v508
        %v540 = vpop.f32.mrf.mxu0
        %v541 = vadd.f32 %v481, %v540
        %v542 = vpop.f32.mrf.mxu0
        %v543 = vadd.f32 %v481, %v542
        %544 = vmatmul.bf16.gmra.mxu0 %v511
        %v545 = vpop.f32.mrf.mxu0
        %v546 = vadd.f32 %v481, %v545
        %v547 = vpop.f32.mrf.mxu0
        %v548 = vadd.f32 %v481, %v547
        %549 = vmatmul.bf16.gmra.mxu0 %v514
        %v550 = vpop.f32.mrf.mxu0
        %v551 = vadd.f32 %v481, %v550
        %v552 = vpop.f32.mrf.mxu0
        %v553 = vadd.f32 %v481, %v552
        %554 = vmatmul.bf16.gmra.mxu0 %v517
        %v555 = vpop.f32.mrf.mxu0
        %v556 = vadd.f32 %v481, %v555
        %v557 = vpop.f32.mrf.mxu0
        %v558 = vadd.f32 %v481, %v557
        %559 = vmatmul.bf16.gmra.mxu0 %v520
        %v560 = vpop.f32.mrf.mxu0
        %v561 = vadd.f32 %v481, %v560
        %v562 = vpop.f32.mrf.mxu0
        %v563 = vadd.f32 %v481, %v562
        %564 = vmatmul.bf16.gmra.mxu0 %v523
        %v565 = vpop.f32.mrf.mxu0
        %v566 = vadd.f32 %v481, %v565
        %v567 = vpop.f32.mrf.mxu0
        %v568 = vadd.f32 %v481, %v567
        %569 = vmatmul.bf16.gmra.mxu0 %v526
        %v570 = vpop.f32.mrf.mxu0
        %v571 = vadd.f32 %v481, %v570
        %v572 = vpop.f32.mrf.mxu0
        %v573 = vadd.f32 %v481, %v572
        %574 = vmatmul.bf16.gmra.mxu0 %v529
        %v575 = vpop.f32.mrf.mxu0
        %v576 = vadd.f32 %v481, %v575
        %v577 = vpop.f32.mrf.mxu0
        %v578 = vadd.f32 %v481, %v577
        %579 = vdwg.mxu0
        %v580 = vmax.f32 %v541, 0.0
        %v581 = vmax.f32 %v543, 0.0
        %v582 = vmax.f32 %v546, 0.0
        %v583 = vmax.f32 %v548, 0.0
        %v584 = vmax.f32 %v551, 0.0
        %v585 = vmax.f32 %v553, 0.0
        %v586 = vmax.f32 %v556, 0.0
        %v587 = vmax.f32 %v558, 0.0
        %v588 = vmax.f32 %v561, 0.0
        %v589 = vmax.f32 %v563, 0.0
        %v590 = vmax.f32 %v566, 0.0
        %v591 = vmax.f32 %v568, 0.0
        %v592 = vmax.f32 %v571, 0.0
        %v593 = vmax.f32 %v573, 0.0
        %v594 = vmax.f32 %v576, 0.0
        %v595 = vmax.f32 %v578, 0.0
        %v596 = vld [vmem:[%s5] sm:$0x1]
        %v597 = vld [vmem:[#allocation2] sm:$0x1]
        %599 = vset.pattern.permute.xlu0 0
        %600 = vperm.xlu0 %599, %v597
        %v601 = vpop.permute.xlu0 %600
        %v603 = vperm.slane %v601, 0
        %v605 = vsel %vm373, %v596, 0
        %v608 = vsel %vm373, %v580, 0
        %v611 = vsel %vm373, %v581, 0
        %v614 = vsel %vm373, %v582, 0
        %v617 = vsel %vm373, %v583, 0
        %v620 = vsel %vm373, %v584, 0
        %v623 = vsel %vm373, %v585, 0
        %v626 = vsel %vm373, %v586, 0
        %v629 = vsel %vm373, %v587, 0
        %v632 = vsel %vm373, %v588, 0
        %v635 = vsel %vm373, %v589, 0
        %v638 = vsel %vm373, %v590, 0
        %v641 = vsel %vm373, %v591, 0
        %v644 = vsel %vm373, %v592, 0
        %v647 = vsel %vm373, %v593, 0
        %v650 = vsel %vm373, %v594, 0
        %v653 = vsel %vm373, %v595, 0
        %655 = vmatpush.xpose.msra.mxu0 %v653
        %656 = vmatpush.xpose.msra.mxu0 %v650
        %657 = vmatpush.xpose.msra.mxu0 %v647
        %658 = vmatpush.xpose.msra.mxu0 %v644
        %659 = vmatpush.xpose.msra.mxu0 %v641
        %660 = vmatpush.xpose.msra.mxu0 %v638
        %661 = vmatpush.xpose.msra.mxu0 %v635
        %662 = vmatpush.xpose.msra.mxu0 %v632
        %663 = vmatpush.xpose.msra.mxu0 %v629
        %664 = vmatpush.xpose.msra.mxu0 %v626
        %665 = vmatpush.xpose.msra.mxu0 %v623
        %666 = vmatpush.xpose.msra.mxu0 %v620
        %667 = vmatpush.xpose.msra.mxu0 %v617
        %668 = vmatpush.xpose.msra.mxu0 %v614
        %669 = vmatpush.xpose.msra.mxu0 %v611
        %670 = vmatpush.xpose.msra.mxu0 %v608
        %671 = vmatmul.f32.gmra.mxu0 %v605
        %v672 = vpop.f32.mrf.mxu0
        %v673 = vadd.f32 %v603, %v672
        %674 = vdwg.mxu0
        %675 = vst [vmem:[%s273] sm:$0x1] %v673
        %s676 = sand.u32 %s183, 1
        %s677 = scalar_lea.sflag [#allocation4], %s676
        %s678 = sand.u32 %s183, 1
        %s679 = scalar_lea.vmem [#allocation3], %s678
        // Predicated region
        $region49: #{link_predictor_forward.1} parent=47 // pred_check
          %p680 = pneg %p193
        $region50: #{link_predictor_forward.1} parent=47 // pred_check_branch
          %682 = sbr.rel (%p680) target = $region52
        $region51: #{link_predictor_forward.1} parent=47 // pred_region
          %684 = vsyncadd %s677, 0
          %s685 = scalar_lea.hbm %s7, %s23
          %s687 = sshll.u32 %s679, 4
          %s688 = int_to_ptr.vmem [resolvable:$true] %s687
          %s689 = sshll.u32 %s685, 4
          %s690 = int_to_ptr.hbm [resolvable:$true] %s689
          %692 = dma.vmem_to_hbm [thread:$0]  %s688, 16, %s690, %s677
        $region52: #{link_predictor_forward.1} parent=47 // pred_fallthru
          _
      $region48: #{link_predictor_forward.1} parent=5 // pred_fallthru
        _
      %p693 = scmp.le.s32.totalorder 2, %s18
      // Predicated region
      $region53: #{link_predictor_forward.1} parent=5 // pred_check
        %p694 = pneg %p693
      $region54: #{link_predictor_forward.1} parent=5 // pred_check_branch
        %696 = sbr.rel (%p694) target = $region56
      $region55: #{link_predictor_forward.1} parent=5 // pred_region
        %s697 = ssub.s32 %s18, 2
        // Predicated region
        $region57: #{link_predictor_forward.1} parent=55 // pred_check
          %p698 = pneg %p199
        $region58: #{link_predictor_forward.1} parent=55 // pred_check_branch
          %700 = sbr.rel (%p698) target = $region60
        $region59: #{link_predictor_forward.1} parent=55 // pred_region
          %s701 = sand.u32 %s184, 1
          %s702 = scalar_lea.sflag [#allocation4], %s701
          %s703 = sand.u32 %s184, 1
          %s704 = scalar_lea.vmem [#allocation3], %s703
          %706 = dma.done %s702, 16
        $region60: #{link_predictor_forward.1} parent=55 // pred_fallthru
          _
      $region56: #{link_predictor_forward.1} parent=5 // pred_fallthru
        _
    $region6: #{link_predictor_forward.1} parent=1 // loop_footer
      %s22 = sadd.s32 1, %s18
    $region7: #{link_predictor_forward.1} parent=1 // loop_footer_branch
      %17 = sbr.rel target = $region3
    $region8: #{link_predictor_forward.1} parent=1 // loop_exit
      _
    %707 = vsyncpa [#allocation4], 1
    %s708 = scalar_lea.sflag [#allocation4], 1
    %709 = vsyncpa %s708, 1

</llo_original>
